<compile_context>
chip_gen: v7x
topology: tpu7x:2x2x1
jax: 0.10.0
libtpu: 0.0.40
codegen_flags: <defaults>
</compile_context>

<pallas_src>
import math

import jax
import jax.numpy as jnp
from jax.experimental import pallas as pl
from jax.experimental.pallas import tpu as pltpu


# ---------------------------------------------------------------------------
# helpers
# ---------------------------------------------------------------------------
def _round_up(x, m):
    return ((x + m - 1) // m) * m


def _vmem_capacity_bytes():
    """Physical VMEM per core, queried lazily per call (review item: don't bake in at import)."""
    cap = 128 * 1024 * 1024
    try:
        info = pltpu.get_tpu_info()
        cap = int(getattr(info, "vmem_capacity_bytes", cap))
    except Exception:
        pass
    return max(cap, 32 * 1024 * 1024)


def _pick_tiles(T, E, H, tf):
    """Chip- and VMEM-aware token-tile size for the grouped expert GEMM.

    With grouped dispatch the expert weights are streamed ~once per expert (not once per token
    tile), so arithmetic intensity ~ tokens-per-expert; growing tm beyond that only adds
    per-expert padding waste.  VMEM footprint per grid step (double buffered):
        x tile   : 2 * tm*H*2   bytes (bf16)
        W1+W2    : 2 * 2*H*tf*2 bytes (bf16)
        out tile : 2 * tm*H*4   bytes (f32, used directly as the accumulator)
    """
    cap = _vmem_capacity_bytes()
    limit = min((cap * 3) // 4, 112 * 1024 * 1024)           # scoped VMEM limit we request
    weight_bytes = 2 * (2 * H * tf * 2)                      # double-buffered W1 + W2 slabs
    budget = int(limit * 0.70) - weight_bytes
    tm_vmem = max(budget // (12 * H), 16)                    # 2*tm*H*2 (x) + 2*tm*H*4 (out)
    tm_pref = 512 if cap <= 64 * 1024 * 1024 else 1024       # v7x (64 MiB) vs v5e/v6e (128 MiB)
    tm_balance = _round_up(max((T + E - 1) // max(E, 1), 16), 16)   # ~ tokens per expert
    tm = max(16, min(tm_pref, int(tm_vmem), tm_balance))
    return _round_up(tm, 16), limit


# ---------------------------------------------------------------------------
# grouped expert MLP kernel
#   grid = (token-tiles, ffn-tiles); every token tile belongs to exactly one expert
#   (per-tile expert id scalar-prefetched into SMEM, used by the weight index_maps).
#   The f32 output tile is resident across the ffn axis and used as the accumulator.
# ---------------------------------------------------------------------------
def _grouped_ffn_kernel(tile_expert_ref, x_ref, w1_ref, w2_ref, g_ref, o_ref):
    del tile_expert_ref  # only consumed by the BlockSpec index_maps
    f = pl.program_id(1)

    @pl.when(f == 0)
    def _():
        o_ref[...] = jnp.zeros_like(o_ref)

    h = jnp.dot(x_ref[...], w1_ref[...], preferred_element_type=jnp.float32)   # [tm, tf]
    h = jax.nn.gelu(h, approximate=True) * g_ref[...]                          # gate on [tm, tf]
    o_ref[...] += jnp.dot(h.astype(w2_ref.dtype), w2_ref[...],
                          preferred_element_type=jnp.float32)                  # [tm, H] f32 acc


def grouped_moe_ffn(x2d, w1, w2, top_idx, top_vals, *, tf, out_dtype=jnp.float32):
    """Grouped (sorted-token) MoE MLP.

    x2d:[M,H] bf16, w1:[E,H,F_pad] bf16, w2:[E,F_pad,H] bf16 (padded at init),
    top_idx:[M,k] int32, top_vals:[M,k] f32  ->  [M,H] out_dtype
    """
    M, H = x2d.shape
    E, H2, F_pad = w1.shape
    k = top_idx.shape[1]
    assert H2 == H and w2.shape == (E, F_pad, H) and F_pad % tf == 0
    T = M * k

    tm, vmem_limit = _pick_tiles(T, E, H, tf)

    # ---- routing glue (plain JAX): sort (token, expert) pairs by expert, pad each expert's
    # ---- group to a multiple of tm so every token tile maps to exactly one expert.
    flat_expert = top_idx.reshape(T).astype(jnp.int32)
    flat_gate = top_vals.reshape(T).astype(jnp.float32)
    flat_token = jnp.repeat(jnp.arange(M, dtype=jnp.int32), k)

    order = jnp.argsort(flat_expert)                      # stable
    sorted_token = flat_token[order]
    sorted_gate = flat_gate[order]

    counts = jnp.bincount(flat_expert, length=E).astype(jnp.int32)            # [E]
    group_start = jnp.concatenate(
        [jnp.zeros((1,), jnp.int32), jnp.cumsum(counts)[:-1].astype(jnp.int32)])
    padded_counts = ((counts + tm - 1) // tm) * tm
    padded_end = jnp.cumsum(padded_counts).astype(jnp.int32)
    padded_start = padded_end - padded_counts

    # static upper bound on sum_e round_up(counts_e, tm)
    T_pad = _round_up(T, tm) + E * tm
    num_tiles = T_pad // tm

    r = jnp.arange(T_pad, dtype=jnp.int32)
    e_of_r = jnp.searchsorted(padded_end, r, side="right").astype(jnp.int32)  # [T_pad] in [0,E]
    e_clip = jnp.minimum(e_of_r, E - 1)
    local = r - padded_start[e_clip]
    valid = (e_of_r < E) & (local < counts[e_clip])
    src = jnp.where(valid, group_start[e_clip] + local, 0)
    row_token = jnp.where(valid, sorted_token[src], M)        # M = dummy (zero) row
    row_gate = jnp.where(valid, sorted_gate[src], jnp.float32(0.0))
    tile_expert = e_clip[0::tm].astype(jnp.int32)             # [num_tiles] scalar-prefetch

    x_pad = jnp.concatenate([x2d, jnp.zeros((1, H), x2d.dtype)], axis=0)      # [M+1, H]
    x_sorted = x_pad[row_token]                                               # [T_pad, H] permute
    gates_col = row_gate[:, None]                                             # [T_pad, 1]

    num_f = F_pad // tf
    grid = (num_tiles, num_f)

    cost = pl.CostEstimate(
        flops=int(4 * T_pad * H * F_pad),               # two GEMMs, 2*M*N*K each
        transcendentals=int(T_pad * F_pad),             # gelu(tanh)
        bytes_accessed=int(T_pad * H * 2                # x read once per row tile
                           + num_tiles * 2 * H * F_pad * 2   # W1+W2 streamed once per row tile
                           + T_pad * 4                  # gates
                           + T_pad * H * 4),            # f32 output write
    )

    y_sorted = pl.pallas_call(
        _grouped_ffn_kernel,
        out_shape=jax.ShapeDtypeStruct((T_pad, H), jnp.float32),
        grid_spec=pltpu.PrefetchScalarGridSpec(
            num_scalar_prefetch=1,
            grid=grid,
            in_specs=[
                pl.BlockSpec((tm, H), lambda t, f, te: (t, 0)),             # x tile (resident over f)
                pl.BlockSpec((None, H, tf), lambda t, f, te: (te[t], 0, f)),  # W1 of this tile's expert
                pl.BlockSpec((None, tf, H), lambda t, f, te: (te[t], f, 0)),  # W2 of this tile's expert
                pl.BlockSpec((tm, 1), lambda t, f, te: (t, 0)),             # per-row gate column
            ],
            out_specs=pl.BlockSpec((tm, H), lambda t, f, te: (t, 0)),
        ),
        compiler_params=pltpu.CompilerParams(
            dimension_semantics=("parallel", "arbitrary"),
            vmem_limit_bytes=vmem_limit,
        ),
        cost_estimate=cost,
    )(tile_expert, x_sorted, w1, w2, gates_col)

    # combine: scatter-add the (already gated) expert outputs back to token order.
    out_pad = jnp.zeros((M + 1, H), jnp.float32).at[row_token].add(y_sorted)
    return out_pad[:M].astype(out_dtype)


# ---------------------------------------------------------------------------
# module wrapper (mirrors _MegablocksAdapter: holds the MoE layer, forward(x) -> moe(x))
# ---------------------------------------------------------------------------
class MegablocksMoEPallas:
    """Single-device, dropless MoE MLP equivalent of the megablocks layer wrapped by
    _MegablocksAdapter.  Weights are stored bf16, matmul-oriented and ffn-padded at init."""

    def __init__(self, hidden_size, ffn_hidden_size, num_experts, top_k, key,
                 dtype=jnp.bfloat16):
        self.hidden_size = hidden_size
        self.ffn_hidden_size = ffn_hidden_size
        self.num_experts = num_experts
        self.top_k = top_k

        # ffn tile chosen once; weights padded once (review item: no per-call padding).
        if ffn_hidden_size <= 512:
            self.tf = ffn_hidden_size
            f_pad = ffn_hidden_size
        else:
            self.tf = 256
            f_pad = _round_up(ffn_hidden_size, 256)
        self.ffn_padded = f_pad

        kr, k1, k2 = jax.random.split(key, 3)
        # Router weight pre-transposed to [hidden, n_experts].
        self.w_router = (jax.random.normal(kr, (hidden_size, num_experts), jnp.float32)
                         * (hidden_size ** -0.5)).astype(dtype)
        # Expert weights in matmul-ready orientation: W1:[E,H,F_pad], W2:[E,F_pad,H].
        w1 = (jax.random.normal(k1, (num_experts, hidden_size, ffn_hidden_size), jnp.float32)
              * (hidden_size ** -0.5)).astype(dtype)
        w2 = (jax.random.normal(k2, (num_experts, ffn_hidden_size, hidden_size), jnp.float32)
              * (ffn_hidden_size ** -0.5)).astype(dtype)
        if f_pad != ffn_hidden_size:
            w1 = jnp.pad(w1, ((0, 0), (0, 0), (0, f_pad - ffn_hidden_size)))
            w2 = jnp.pad(w2, ((0, 0), (0, f_pad - ffn_hidden_size), (0, 0)))
        self.w1, self.w2 = w1, w2

    def __call__(self, x):
        # x: [batch, seq, hidden] (or [seq, batch, hidden]; token dims are flattened anyway)
        *lead, h = x.shape
        assert h == self.hidden_size
        m = math.prod(lead)
        xb = x.reshape(m, h).astype(jnp.bfloat16)

        # --- router: plain JAX (negligible FLOPs; lets XLA fuse softmax/top-k) --------------
        logits = jnp.dot(xb, self.w_router, preferred_element_type=jnp.float32)    # [M, E]
        probs = jax.nn.softmax(logits, axis=-1)
        top_vals, top_idx = jax.lax.top_k(probs, self.top_k)                       # [M, k]

        # --- grouped expert GEMMs + gated combine (Pallas) ----------------------------------
        out2d = grouped_moe_ffn(xb, self.w1, self.w2, top_idx, top_vals,
                                tf=self.tf, out_dtype=jnp.float32)
        # megablocks MoE returns (output, bias); bias is disabled here.
        return out2d.astype(x.dtype).reshape(x.shape), None


# ---------------------------------------------------------------------------
# reference + self-test
# ---------------------------------------------------------------------------
def moe_reference(x, layer):
    """Dense-over-experts reference: out = sum_e gate_e * (gelu(x W1_e) W2_e).
    The (scalar) gate commutes with the linear map; it is applied to h here to match the
    kernel's bf16-cast placement exactly."""
    *lead, H = x.shape
    m = math.prod(lead)
    xb = x.reshape(m, H).astype(jnp.bfloat16)
    logits = jnp.dot(xb, layer.w_router, preferred_element_type=jnp.float32)
    probs = jax.nn.softmax(logits, axis=-1)
    top_vals, top_idx = jax.lax.top_k(probs, layer.top_k)
    gates = jnp.sum(top_vals[..., None]
                    * jax.nn.one_hot(top_idx, layer.num_experts, dtype=jnp.float32),
                    axis=1)                                                  # [m, E]
    h = jnp.einsum("mh,ehf->emf", xb, layer.w1, preferred_element_type=jnp.float32)
    h = jax.nn.gelu(h, approximate=True) * gates.T[:, :, None]
    y = jnp.einsum("emf,efh->emh", h.astype(jnp.bfloat16), layer.w2,
                   preferred_element_type=jnp.float32)
    out = jnp.sum(y, axis=0)
    return out.reshape(x.shape).astype(x.dtype)


if __name__ == "__main__":
    def run_case(batch, seq, hidden, ffn, n_experts, top_k, seed):
        key = jax.random.PRNGKey(seed)
        k_x, k_layer = jax.random.split(key)
        x = jax.random.normal(k_x, (batch, seq, hidden), dtype=jnp.float32)
        layer = MegablocksMoEPallas(hidden, ffn, n_experts, top_k, k_layer)

        out, bias = layer(x)
        out = jax.block_until_ready(out)

        ref = moe_reference(x, layer)
        assert out.shape == x.shape
        assert bias is None
        err = float(jnp.max(jnp.abs(out - ref)))
        assert jnp.allclose(out, ref, atol=2e-2, rtol=2e-2), err

    # small shapes consistent with the module
    run_case(batch=2, seq=8, hidden=32, ffn=64, n_experts=4, top_k=2, seed=0)
    # multi-tile case: several token tiles AND several ffn tiles, exercising the resident-
    # accumulator init/finalize and the scalar-prefetched per-tile expert weight indexing.
    run_case(batch=2, seq=256, hidden=256, ffn=1024, n_experts=8, top_k=2, seed=1)

    print("KERNEL_OK")
</pallas_src>

<mosaic_0001>
module attributes {stable_mosaic.version = 11 : i64} {
  func.func @_grouped_ffn_kernel(%arg0: i32, %arg1: i32, %arg2: memref<6xi32, #tpu.memory_space<smem>>, %arg3: memref<16x32xbf16, #tpu.memory_space<vmem>>, %arg4: memref<1x32x64xbf16, #tpu.memory_space<vmem>>, %arg5: memref<1x64x32xbf16, #tpu.memory_space<vmem>>, %arg6: memref<16x1xf32, #tpu.memory_space<vmem>>, %arg7: memref<16x32xf32, #tpu.memory_space<vmem>>) attributes {dimension_semantics = [#tpu.dimension_semantics<parallel>, #tpu.dimension_semantics<arbitrary>], iteration_bounds = array<i64: 6, 1>, scalar_prefetch = 1 : i64, scratch_operands = 0 : i64, tpu.core_type = #tpu.core_type<tc>, window_params = [{transform_indices = @transform_0, window_bounds = array<i64: 16, 32>}, {transform_indices = @transform_1, window_bounds = array<i64: 1, 32, 64>}, {transform_indices = @transform_2, window_bounds = array<i64: 1, 64, 32>}, {transform_indices = @transform_3, window_bounds = array<i64: 16, 1>}, {transform_indices = @transform_4, window_bounds = array<i64: 16, 32>}]} {
    %c0_i32 = arith.constant 0 : i32
    %0 = arith.cmpi eq, %arg1, %c0_i32 : i32
    %1 = arith.extui %0 : i1 to i32
    %c0_i32_0 = arith.constant 0 : i32
    %2 = arith.cmpi ne, %1, %c0_i32_0 : i32
    scf.if %2 {
      %cst_19 = arith.constant 0.000000e+00 : f32
      %30 = vector.broadcast %cst_19 : f32 to vector<16x32xf32>
      %c0_20 = arith.constant 0 : index
      %c0_21 = arith.constant 0 : index
      %31 = vector.load %arg7[%c0_20, %c0_21] : memref<16x32xf32, #tpu.memory_space<vmem>>, vector<16x32xf32>
      tpu.vector_store %arg7[%c0_20, %c0_21], %30 {strides = array<i32>} : memref<16x32xf32, #tpu.memory_space<vmem>>, vector<16x32xf32>,
    } else {
    }
    %c0 = arith.constant 0 : index
    %c0_1 = arith.constant 0 : index
    %3 = vector.load %arg3[%c0, %c0_1] : memref<16x32xbf16, #tpu.memory_space<vmem>>, vector<16x32xbf16>
    %c0_2 = arith.constant 0 : index
    %c0_3 = arith.constant 0 : index
    %c0_4 = arith.constant 0 : index
    %4 = vector.load %arg4[%c0_2, %c0_3, %c0_4] : memref<1x32x64xbf16, #tpu.memory_space<vmem>>, vector<1x32x64xbf16>
    %5 = vector.shape_cast %4 : vector<1x32x64xbf16> to vector<32x64xbf16>
    %cst = arith.constant dense<0.000000e+00> : vector<16x64xf32>
    %6 = tpu.matmul %3, %5, %cst {dimension_numbers = #tpu.dot_dimension_numbers<[1], [0], [0], [1], [0, 0, 1, 1], [], []>} : vector<16x32xbf16>, vector<32x64xbf16>, vector<16x64xf32> -> vector<16x64xf32>
    %7 = arith.mulf %6, %6 : vector<16x64xf32>
    %8 = arith.mulf %6, %7 : vector<16x64xf32>
    %cst_5 = arith.constant 4.471500e-02 : f32
    %9 = vector.broadcast %cst_5 : f32 to vector<16x64xf32>
    %10 = arith.mulf %9, %8 : vector<16x64xf32>
    %11 = arith.addf %6, %10 : vector<16x64xf32>
    %cst_6 = arith.constant 0.797884583 : f32
    %12 = vector.broadcast %cst_6 : f32 to vector<16x64xf32>
    %13 = arith.mulf %12, %11 : vector<16x64xf32>
    %14 = math.tanh %13 : vector<16x64xf32>
    %cst_7 = arith.constant 1.000000e+00 : f32
    %15 = vector.broadcast %cst_7 : f32 to vector<16x64xf32>
    %16 = arith.addf %15, %14 : vector<16x64xf32>
    %cst_8 = arith.constant 5.000000e-01 : f32
    %17 = vector.broadcast %cst_8 : f32 to vector<16x64xf32>
    %18 = arith.mulf %17, %16 : vector<16x64xf32>
    %19 = arith.mulf %6, %18 : vector<16x64xf32>
    %c0_9 = arith.constant 0 : index
    %c0_10 = arith.constant 0 : index
    %20 = vector.load %arg6[%c0_9, %c0_10] : memref<16x1xf32, #tpu.memory_space<vmem>>, vector<16x1xf32>
    %21 = vector.broadcast %20 : vector<16x1xf32> to vector<16x64xf32>
    %22 = arith.mulf %19, %21 : vector<16x64xf32>
    %c0_11 = arith.constant 0 : index
    %c0_12 = arith.constant 0 : index
    %23 = vector.load %arg7[%c0_11, %c0_12] : memref<16x32xf32, #tpu.memory_space<vmem>>, vector<16x32xf32>
    %24 = arith.truncf %22 : vector<16x64xf32> to vector<16x64xbf16>
    %c0_13 = arith.constant 0 : index
    %c0_14 = arith.constant 0 : index
    %c0_15 = arith.constant 0 : index
    %25 = vector.load %arg5[%c0_13, %c0_14, %c0_15] : memref<1x64x32xbf16, #tpu.memory_space<vmem>>, vector<1x64x32xbf16>
    %26 = vector.shape_cast %25 : vector<1x64x32xbf16> to vector<64x32xbf16>
    %cst_16 = arith.constant dense<0.000000e+00> : vector<16x32xf32>
    %27 = tpu.matmul %24, %26, %cst_16 {dimension_numbers = #tpu.dot_dimension_numbers<[1], [0], [0], [1], [0, 0, 1, 1], [], []>} : vector<16x64xbf16>, vector<64x32xbf16>, vector<16x32xf32> -> vector<16x32xf32>
    %28 = arith.addf %23, %27 : vector<16x32xf32>
    %c0_17 = arith.constant 0 : index
    %c0_18 = arith.constant 0 : index
    %29 = vector.load %arg7[%c0_17, %c0_18] : memref<16x32xf32, #tpu.memory_space<vmem>>, vector<16x32xf32>
    tpu.vector_store %arg7[%c0_17, %c0_18], %28 {strides = array<i32>} : memref<16x32xf32, #tpu.memory_space<vmem>>, vector<16x32xf32>,
    return
  }
  func.func @transform_0(%arg0: i32, %arg1: i32, %arg2: memref<6xi32, #tpu.memory_space<smem>>) -> (i32, i32) {
    %c0_i32 = arith.constant 0 : i32
    %c0_i32_0 = arith.constant 0 : i32
    return %arg0, %c0_i32 : i32, i32
  }
  func.func @transform_1(%arg0: i32, %arg1: i32, %arg2: memref<6xi32, #tpu.memory_space<smem>>) -> (i32, i32, i32) {
    %0 = arith.index_cast %arg0 : i32 to index
    %1 = memref.load %arg2[%0] : memref<6xi32, #tpu.memory_space<smem>>
    %c0_i32 = arith.constant 0 : i32
    %c0_i32_0 = arith.constant 0 : i32
    return %1, %c0_i32, %arg1 : i32, i32, i32
  }
  func.func @transform_2(%arg0: i32, %arg1: i32, %arg2: memref<6xi32, #tpu.memory_space<smem>>) -> (i32, i32, i32) {
    %0 = arith.index_cast %arg0 : i32 to index
    %1 = memref.load %arg2[%0] : memref<6xi32, #tpu.memory_space<smem>>
    %c0_i32 = arith.constant 0 : i32
    %c0_i32_0 = arith.constant 0 : i32
    return %1, %arg1, %c0_i32 : i32, i32, i32
  }
  func.func @transform_3(%arg0: i32, %arg1: i32, %arg2: memref<6xi32, #tpu.memory_space<smem>>) -> (i32, i32) {
    %c0_i32 = arith.constant 0 : i32
    %c0_i32_0 = arith.constant 0 : i32
    return %arg0, %c0_i32 : i32, i32
  }
  func.func @transform_4(%arg0: i32, %arg1: i32, %arg2: memref<6xi32, #tpu.memory_space<smem>>) -> (i32, i32) {
    %c0_i32 = arith.constant 0 : i32
    %c0_i32_0 = arith.constant 0 : i32
    return %arg0, %c0_i32 : i32, i32
  }
}

</mosaic_0001>

<llo_original>
// kernel: tpu_custom_call.1
$region0: #{tpu_custom_call.1}
  #allocation0 [shape = 'u32[]', space=smem, size = 0x4, offset = 0x4, fixed_abs, tag = 'smem constant byte address 0x4 - core index']
  #allocation1 [shape = 'u32[144,128]{1,0:T(1,128)}', space=vmem, size = 0x12000, scoped, tag = 'internal scratch']
  #allocation2 [shape = 's32[1]{0}', space=sflag, size = 0x4, scoped, tag = 'scoped memory for tpu_custom_call.1']
  #allocation3 [shape = 'u8[512]{0}', space=smem, size = 0x200, scoped, tag = 'prefetched SMEM operand 0']
  %s0 = inlined_call_operand.hbm [shape: s32[6], index: 0, kind: input, shape index: {}]
  %s1 = inlined_call_operand.hbm [shape: bf16[96,32], index: 1, kind: input, shape index: {}]
  %s2 = inlined_call_operand.hbm [shape: bf16[4,32,64], index: 2, kind: input, shape index: {}]
  %s3 = inlined_call_operand.hbm [shape: bf16[4,64,32], index: 3, kind: input, shape index: {}]
  %s4 = inlined_call_operand.hbm [shape: f32[96,1], index: 4, kind: input, shape index: {}]
  %s5 = inlined_call_operand.hbm [shape: f32[96,32], index: 5, kind: output, shape index: {}]
  %s6 = sld [smem:[#allocation0]]
  $region69: #{tpu_custom_call.1} parent=0
    _
  %s8 = ssub.s32 1, %s6
  %s9 = scalar_select 0, %s8, %s6
  %11 = dma.hbm_to_smem %s0, 16, [#allocation3], [#allocation2]
  %12 = dma.done [#allocation2], 16
  %13 = sfence
  $region1: #{tpu_custom_call.1} parent=0
    #allocation4 [shape = 'u8[8192]{0}', space=vmem, size = 0x2000, scoped, tag = 'input window, operand 1']
    #allocation5 [shape = 's32[2]{0}', space=sflag, size = 0x8, scoped, tag = 'scoped memory for tpu_custom_call.1']
    #allocation6 [shape = 's32[2]{0}', space=sflag, size = 0x8, scoped, tag = 'scoped memory for tpu_custom_call.1']
    #allocation7 [shape = 'u8[16384]{0}', space=vmem, size = 0x4000, scoped, tag = 'input window, operand 2']
    #allocation8 [shape = 's32[2]{0}', space=sflag, size = 0x8, scoped, tag = 'scoped memory for tpu_custom_call.1']
    #allocation9 [shape = 'u8[32768]{0}', space=vmem, size = 0x8000, scoped, tag = 'input window, operand 3']
    #allocation10 [shape = 'u8[16384]{0}', space=vmem, size = 0x4000, scoped, tag = 'input window, operand 4']
    #allocation11 [shape = 's32[2]{0}', space=sflag, size = 0x8, scoped, tag = 'scoped memory for tpu_custom_call.1']
    #allocation12 [shape = 'u8[16384]{0}', space=vmem, size = 0x4000, scoped, tag = 'output window, operand 0']
    %14 = vsyncpa [#allocation5], 0
    %s15 = scalar_lea.sflag [#allocation5], 1
    %16 = vsyncpa %s15, 0
    %17 = vsyncpa [#allocation8], 0
    %s18 = scalar_lea.sflag [#allocation8], 1
    %19 = vsyncpa %s18, 0
    %20 = vsyncpa [#allocation11], 0
    %s21 = scalar_lea.sflag [#allocation11], 1
    %22 = vsyncpa %s21, 0
    %23 = vsyncpa [#allocation6], 0
    %s24 = scalar_lea.sflag [#allocation6], 1
    %25 = vsyncpa %s24, 0
    loop: start=0, step=1, limit=8
    $region2: #{tpu_custom_call.1} parent=1 // loop_pre_header
      _
    $region3: #{tpu_custom_call.1} parent=1 // loop_header
      %s27 = sphi 0, %s31
      %p28 = scmp.ge.s32.totalorder %s27, 8
      %s34 = sphi 0, %s46
      %s35 = sphi 0, %s42
      %s36 = sphi 0, %s34
      %s37 = sphi 0, %s35
      %s38 = sphi 0, %s36
      %s39 = sphi 0, %s37
      %s49 = sphi 0, %s51
      %s52 = sphi 0, %s49
      %s53 = sphi 0, %s52
      %s69 = sphi 0, %s53
      %s79 = sphi 0, %s81
      %s82 = sphi 0, %s79
      %s83 = sphi 0, %s82
      %s99 = sphi 0, %s83
      %s109 = sphi 0, %s111
      %s112 = sphi 0, %s109
      %s113 = sphi 0, %s112
      %s129 = sphi 0, %s113
      %s135 = sphi 0, %s137
      %s138 = sphi 0, %s135
      %s139 = sphi 0, %s138
      %s155 = sphi 0, %s139
      %s161 = sphi 0, %s163
      %s164 = sphi 0, %s161
      %s165 = sphi 0, %s164
      %s181 = sphi 0, %s165
    $region4: #{tpu_custom_call.1} parent=1 // loop_header_branch
      %30 = sbr.rel (%p28) target = $region8
    $region5: #{tpu_custom_call.1} parent=1 // loop_body
      %s32 = ssub.s32 %s27, 1
      %s33 = ssub.s32 %s27, 2
      %s40 = sadd.s32 1, %s35
      %p41 = scmp.ge.s32.totalorder %s40, 1
      %s42 = scalar_select %p41, 0, %s40
      %s43 = sadd.s32 1, %s34
      %s44 = scalar_select %p41, %s43, %s34
      %p45 = scmp.ge.s32.totalorder %s44, 6
      %s46 = scalar_select %p45, 0, %s44
      %s47 = ssub.s32 %s34, %s46
      %p48 = scmp.eq.s32.totalorder %s47, 0
      %s50 = sadd.s32 %s49, 1
      %s51 = scalar_select %p48, %s49, %s50
      %p54 = pneg %p48
      %p55 = scmp.eq.s32.totalorder %s27, 5
      %p56 = por %p54, %p55
      %p57 = scmp.ne.s32.totalorder %s49, %s52
      %p58 = scmp.eq.s32.totalorder %s27, 0
      %p59 = por %p57, %p58
      %p60 = scmp.ne.s32.totalorder %s49, %s52
      %p61 = scmp.eq.s32.totalorder %s32, 5
      %p62 = por %p60, %p61
      %p63 = scmp.ne.s32.totalorder %s52, %s53
      %p64 = scmp.eq.s32.totalorder %s32, 0
      %p65 = por %p63, %p64
      %p66 = scmp.ne.s32.totalorder %s52, %s53
      %p67 = scmp.eq.s32.totalorder %s33, 5
      %p68 = por %p66, %p67
      %p70 = scmp.ne.s32.totalorder %s53, %s69
      %p71 = scmp.eq.s32.totalorder %s33, 0
      %p72 = por %p70, %p71
      %s73 = sld [smem:[#allocation3 + %s34]]
      %s74 = sld [smem:[#allocation3 + %s46]]
      %s75 = ssub.s32 %s73, %s74
      %s76 = ssub.s32 %s35, %s42
      %s77 = sor.u32 %s75, %s76
      %p78 = scmp.eq.s32.totalorder %s77, 0
      %s80 = sadd.s32 %s79, 1
      %s81 = scalar_select %p78, %s79, %s80
      %p84 = pneg %p78
      %p85 = scmp.eq.s32.totalorder %s27, 5
      %p86 = por %p84, %p85
      %p87 = scmp.ne.s32.totalorder %s79, %s82
      %p88 = scmp.eq.s32.totalorder %s27, 0
      %p89 = por %p87, %p88
      %p90 = scmp.ne.s32.totalorder %s79, %s82
      %p91 = scmp.eq.s32.totalorder %s32, 5
      %p92 = por %p90, %p91
      %p93 = scmp.ne.s32.totalorder %s82, %s83
      %p94 = scmp.eq.s32.totalorder %s32, 0
      %p95 = por %p93, %p94
      %p96 = scmp.ne.s32.totalorder %s82, %s83
      %p97 = scmp.eq.s32.totalorder %s33, 5
      %p98 = por %p96, %p97
      %p100 = scmp.ne.s32.totalorder %s83, %s99
      %p101 = scmp.eq.s32.totalorder %s33, 0
      %p102 = por %p100, %p101
      %s103 = sld [smem:[#allocation3 + %s34]]
      %s104 = sld [smem:[#allocation3 + %s46]]
      %s105 = ssub.s32 %s103, %s104
      %s106 = ssub.s32 %s35, %s42
      %s107 = sor.u32 %s105, %s106
      %p108 = scmp.eq.s32.totalorder %s107, 0
      %s110 = sadd.s32 %s109, 1
      %s111 = scalar_select %p108, %s109, %s110
      %p114 = pneg %p108
      %p115 = scmp.eq.s32.totalorder %s27, 5
      %p116 = por %p114, %p115
      %p117 = scmp.ne.s32.totalorder %s109, %s112
      %p118 = scmp.eq.s32.totalorder %s27, 0
      %p119 = por %p117, %p118
      %p120 = scmp.ne.s32.totalorder %s109, %s112
      %p121 = scmp.eq.s32.totalorder %s32, 5
      %p122 = por %p120, %p121
      %p123 = scmp.ne.s32.totalorder %s112, %s113
      %p124 = scmp.eq.s32.totalorder %s32, 0
      %p125 = por %p123, %p124
      %p126 = scmp.ne.s32.totalorder %s112, %s113
      %p127 = scmp.eq.s32.totalorder %s33, 5
      %p128 = por %p126, %p127
      %p130 = scmp.ne.s32.totalorder %s113, %s129
      %p131 = scmp.eq.s32.totalorder %s33, 0
      %p132 = por %p130, %p131
      %s133 = ssub.s32 %s34, %s46
      %p134 = scmp.eq.s32.totalorder %s133, 0
      %s136 = sadd.s32 %s135, 1
      %s137 = scalar_select %p134, %s135, %s136
      %p140 = pneg %p134
      %p141 = scmp.eq.s32.totalorder %s27, 5
      %p142 = por %p140, %p141
      %p143 = scmp.ne.s32.totalorder %s135, %s138
      %p144 = scmp.eq.s32.totalorder %s27, 0
      %p145 = por %p143, %p144
      %p146 = scmp.ne.s32.totalorder %s135, %s138
      %p147 = scmp.eq.s32.totalorder %s32, 5
      %p148 = por %p146, %p147
      %p149 = scmp.ne.s32.totalorder %s138, %s139
      %p150 = scmp.eq.s32.totalorder %s32, 0
      %p151 = por %p149, %p150
      %p152 = scmp.ne.s32.totalorder %s138, %s139
      %p153 = scmp.eq.s32.totalorder %s33, 5
      %p154 = por %p152, %p153
      %p156 = scmp.ne.s32.totalorder %s139, %s155
      %p157 = scmp.eq.s32.totalorder %s33, 0
      %p158 = por %p156, %p157
      %s159 = ssub.s32 %s34, %s46
      %p160 = scmp.eq.s32.totalorder %s159, 0
      %s162 = sadd.s32 %s161, 1
      %s163 = scalar_select %p160, %s161, %s162
      %p166 = pneg %p160
      %p167 = scmp.eq.s32.totalorder %s27, 5
      %p168 = por %p166, %p167
      %p169 = scmp.ne.s32.totalorder %s161, %s164
      %p170 = scmp.eq.s32.totalorder %s27, 0
      %p171 = por %p169, %p170
      %p172 = scmp.ne.s32.totalorder %s161, %s164
      %p173 = scmp.eq.s32.totalorder %s32, 5
      %p174 = por %p172, %p173
      %p175 = scmp.ne.s32.totalorder %s164, %s165
      %p176 = scmp.eq.s32.totalorder %s32, 0
      %p177 = por %p175, %p176
      %p178 = scmp.ne.s32.totalorder %s164, %s165
      %p179 = scmp.eq.s32.totalorder %s33, 5
      %p180 = por %p178, %p179
      %p182 = scmp.ne.s32.totalorder %s165, %s181
      %p183 = scmp.eq.s32.totalorder %s33, 0
      %p184 = por %p182, %p183
      %p185 = scmp.le.s32.totalorder 1, %s27
      %p186 = scmp.lt.s32.totalorder %s27, 7
      %p187 = pnand %p185, %p186
      %p188 = pneg %p187
      // Predicated region
      $region9: #{tpu_custom_call.1} parent=5 // pred_check
        _
      $region10: #{tpu_custom_call.1} parent=5 // pred_check_branch
        %190 = sbr.rel (%p187) target = $region12
      $region11: #{tpu_custom_call.1} parent=5 // pred_region
        %s191 = ssub.s32 %s27, 1
      $region12: #{tpu_custom_call.1} parent=5 // pred_fallthru
        _
      %p192 = scmp.lt.s32.totalorder %s27, 6
      // Predicated region
      $region13: #{tpu_custom_call.1} parent=5 // pred_check
        %p193 = pneg %p192
      $region14: #{tpu_custom_call.1} parent=5 // pred_check_branch
        %195 = sbr.rel (%p193) target = $region16
      $region15: #{tpu_custom_call.1} parent=5 // pred_region
        // Predicated region
        $region17: #{tpu_custom_call.1} parent=15 // pred_check
          %p196 = pneg %p59
        $region18: #{tpu_custom_call.1} parent=15 // pred_check_branch
          %198 = sbr.rel (%p196) target = $region20
        $region19: #{tpu_custom_call.1} parent=15 // pred_region
          %s199 = sand.u32 %s49, 1
          %s200 = scalar_lea.sflag [#allocation5], %s199
          %s201 = sand.u32 %s49, 1
          %s202 = smul.addr %s201, 8
          %s203 = scalar_lea.vmem [#allocation4], %s202
          %s204 = smul.u32 2, %s34
          %s206 = ssub.s32 128, 128
          %207 = vsyncadd %s200, %s206
          %s208 = smul.addr %s204, 64
          %s209 = scalar_lea.hbm %s1, %s208
          %s210 = sshll.u32 %s203, 4
          %s211 = int_to_ptr.vmem [resolvable:$true] %s210
          %216 = dma.hbm_to_vmem [thread:$0]  %s209, 128, %s211, %s200, 64, 64, 4
        $region20: #{tpu_custom_call.1} parent=15 // pred_fallthru
          _
        // Predicated region
        $region21: #{tpu_custom_call.1} parent=15 // pred_check
          %p217 = pneg %p89
        $region22: #{tpu_custom_call.1} parent=15 // pred_check_branch
          %219 = sbr.rel (%p217) target = $region24
        $region23: #{tpu_custom_call.1} parent=15 // pred_region
          %s220 = sand.u32 %s27, 1
          %s221 = scalar_lea.sflag [#allocation8], %s220
          %s222 = sand.u32 %s79, 1
          %s223 = smul.addr %s222, 16
          %s224 = scalar_lea.vmem [#allocation7], %s223
          %s225 = sld [smem:[#allocation3 + %s34]]
          %s227 = ssub.s32 256, 256
          %228 = vsyncadd %s221, %s227
          %s229 = smul.addr %s225, 4
          %s230 = sadd.s32 %s35, %s229
          %s231 = smul.addr %s230, 64
          %s232 = scalar_lea.hbm %s2, %s231
          %s233 = sshll.u32 %s224, 4
          %s234 = int_to_ptr.vmem [resolvable:$true] %s233
          %239 = dma.hbm_to_vmem [thread:$0]  %s232, 256, %s234, %s221, 64, 64, 4
        $region24: #{tpu_custom_call.1} parent=15 // pred_fallthru
          _
        // Predicated region
        $region25: #{tpu_custom_call.1} parent=15 // pred_check
          %p240 = pneg %p119
        $region26: #{tpu_custom_call.1} parent=15 // pred_check_branch
          %242 = sbr.rel (%p240) target = $region28
        $region27: #{tpu_custom_call.1} parent=15 // pred_region
          %s243 = sand.u32 %s27, 1
          %s244 = scalar_lea.sflag [#allocation8], %s243
          %s245 = sand.u32 %s109, 1
          %s246 = smul.addr %s245, 32
          %s247 = scalar_lea.vmem [#allocation9], %s246
          %s248 = sld [smem:[#allocation3 + %s34]]
          %s249 = smul.u32 8, %s35
          %s251 = ssub.s32 512, 512
          %252 = vsyncadd %s244, %s251
          %s253 = smul.addr %s248, 8
          %s254 = sadd.s32 %s249, %s253
          %s255 = smul.addr %s254, 64
          %s256 = scalar_lea.hbm %s3, %s255
          %s257 = sshll.u32 %s247, 4
          %s258 = int_to_ptr.vmem [resolvable:$true] %s257
          %263 = dma.hbm_to_vmem [thread:$0]  %s256, 512, %s258, %s244, 64, 64, 4
        $region28: #{tpu_custom_call.1} parent=15 // pred_fallthru
          _
        // Predicated region
        $region29: #{tpu_custom_call.1} parent=15 // pred_check
          %p264 = pneg %p145
        $region30: #{tpu_custom_call.1} parent=15 // pred_check_branch
          %266 = sbr.rel (%p264) target = $region32
        $region31: #{tpu_custom_call.1} parent=15 // pred_region
          %s267 = sand.u32 %s135, 1
          %s268 = scalar_lea.sflag [#allocation11], %s267
          %s269 = sand.u32 %s135, 1
          %s270 = smul.addr %s269, 16
          %s271 = scalar_lea.vmem [#allocation10], %s270
          %s272 = smul.u32 2, %s34
          %s274 = ssub.s32 256, 256
          %275 = vsyncadd %s268, %s274
          %s276 = smul.addr %s272, 128
          %s277 = scalar_lea.hbm %s4, %s276
          %s278 = sshll.u32 %s271, 4
          %s279 = int_to_ptr.vmem [resolvable:$true] %s278
          %284 = dma.hbm_to_vmem [thread:$0]  %s277, 256, %s279, %s268, 128, 128, 8
        $region32: #{tpu_custom_call.1} parent=15 // pred_fallthru
          _
      $region16: #{tpu_custom_call.1} parent=5 // pred_fallthru
        _
      %p285 = scmp.le.s32.totalorder 1, %s27
      %p286 = scmp.lt.s32.totalorder %s27, 7
      %p287 = pnand %p285, %p286
      %p288 = pneg %p287
      // Predicated region
      $region33: #{tpu_custom_call.1} parent=5 // pred_check
        _
      $region34: #{tpu_custom_call.1} parent=5 // pred_check_branch
        %290 = sbr.rel (%p287) target = $region36
      $region35: #{tpu_custom_call.1} parent=5 // pred_region
        %s291 = ssub.s32 %s27, 1
        %s292 = sand.u32 %s52, 1
        %s293 = scalar_lea.sflag [#allocation5], %s292
        %s294 = sand.u32 %s52, 1
        %s295 = smul.addr %s294, 8
        %s296 = scalar_lea.vmem [#allocation4], %s295
        // Predicated region
        $region37: #{tpu_custom_call.1} parent=35 // pred_check
          %p297 = pneg %p65
        $region38: #{tpu_custom_call.1} parent=35 // pred_check_branch
          %299 = sbr.rel (%p297) target = $region40
        $region39: #{tpu_custom_call.1} parent=35 // pred_region
          %300 = dma.done %s293, 128
        $region40: #{tpu_custom_call.1} parent=35 // pred_fallthru
          _
        %s301 = sand.u32 %s32, 1
        %s302 = scalar_lea.sflag [#allocation8], %s301
        %s303 = sand.u32 %s82, 1
        %s304 = smul.addr %s303, 16
        %s305 = scalar_lea.vmem [#allocation7], %s304
        // Predicated region
        $region41: #{tpu_custom_call.1} parent=35 // pred_check
          %p306 = pneg %p95
        $region42: #{tpu_custom_call.1} parent=35 // pred_check_branch
          %308 = sbr.rel (%p306) target = $region44
        $region43: #{tpu_custom_call.1} parent=35 // pred_region
          %309 = dma.done %s302, 256
        $region44: #{tpu_custom_call.1} parent=35 // pred_fallthru
          _
        %s310 = sand.u32 %s32, 1
        %s311 = scalar_lea.sflag [#allocation8], %s310
        %s312 = sand.u32 %s112, 1
        %s313 = smul.addr %s312, 32
        %s314 = scalar_lea.vmem [#allocation9], %s313
        // Predicated region
        $region45: #{tpu_custom_call.1} parent=35 // pred_check
          %p315 = pneg %p125
        $region46: #{tpu_custom_call.1} parent=35 // pred_check_branch
          %317 = sbr.rel (%p315) target = $region48
        $region47: #{tpu_custom_call.1} parent=35 // pred_region
          %318 = dma.done %s311, 512
        $region48: #{tpu_custom_call.1} parent=35 // pred_fallthru
          _
        %s319 = sand.u32 %s138, 1
        %s320 = scalar_lea.sflag [#allocation11], %s319
        %s321 = sand.u32 %s138, 1
        %s322 = smul.addr %s321, 16
        %s323 = scalar_lea.vmem [#allocation10], %s322
        // Predicated region
        $region49: #{tpu_custom_call.1} parent=35 // pred_check
          %p324 = pneg %p151
        $region50: #{tpu_custom_call.1} parent=35 // pred_check_branch
          %326 = sbr.rel (%p324) target = $region52
        $region51: #{tpu_custom_call.1} parent=35 // pred_region
          %327 = dma.done %s320, 256
        $region52: #{tpu_custom_call.1} parent=35 // pred_fallthru
          _
        %s328 = sand.u32 %s52, 1
        %s329 = scalar_lea.sflag [#allocation5], %s328
        %s330 = sand.u32 %s52, 1
        %s331 = smul.addr %s330, 8
        %s332 = scalar_lea.vmem [#allocation4], %s331
        %p333 = pneg %p65
        %p334 = pneg %p62
        %s335 = sand.u32 %s32, 1
        %s336 = scalar_lea.sflag [#allocation8], %s335
        %s337 = sand.u32 %s82, 1
        %s338 = smul.addr %s337, 16
        %s339 = scalar_lea.vmem [#allocation7], %s338
        %p340 = pneg %p95
        %p341 = pneg %p92
        %s342 = sand.u32 %s32, 1
        %s343 = scalar_lea.sflag [#allocation8], %s342
        %s344 = sand.u32 %s112, 1
        %s345 = smul.addr %s344, 32
        %s346 = scalar_lea.vmem [#allocation9], %s345
        %p347 = pneg %p125
        %p348 = pneg %p122
        %s349 = sand.u32 %s138, 1
        %s350 = scalar_lea.sflag [#allocation11], %s349
        %s351 = sand.u32 %s138, 1
        %s352 = smul.addr %s351, 16
        %s353 = scalar_lea.vmem [#allocation10], %s352
        %p354 = pneg %p151
        %p355 = pneg %p148
        %p356 = pneg %p177
        %p357 = pneg %p174
        %s358 = sand.u32 %s164, 1
        %s359 = scalar_lea.sflag [#allocation6], %s358
        %s360 = sand.u32 %s164, 1
        %s361 = smul.addr %s360, 16
        %s362 = scalar_lea.vmem [#allocation12], %s361
        %s363 = smul.u32 2, %s36
        %s364 = sld [smem:[#allocation3 + %s36]]
        %s365 = sld [smem:[#allocation3 + %s36]]
        %s366 = smul.u32 8, %s37
        %s367 = smul.u32 2, %s36
        %s368 = smul.u32 2, %s36
        %p370 = scmp.eq.s32.totalorder %s37, 0
        // Predicated region
        $region53: #{tpu_custom_call.1} parent=35 // pred_check
          %p371 = pneg %p370
        $region54: #{tpu_custom_call.1} parent=35 // pred_check_branch
          %373 = sbr.rel (%p371) target = $region56
        $region55: #{tpu_custom_call.1} parent=35 // pred_region
          %vm374 = vcmask 261120
          %375 = vst.msk [vmem:[%s362] sm:$0xff] %vm374, 0.0
          %376 = vst.msk [vmem:[%s362 + $0x8] sm:$0xff] %vm374, 0.0
        $region56: #{tpu_custom_call.1} parent=35 // pred_fallthru
          _
        %v377 = vld [vmem:[%s296] sm:$0xf]
        %v378 = vld [vmem:[%s296 + $0x4] sm:$0xf]
        %v379 = vld [vmem:[%s305] sm:$0xf]
        %v380 = vld [vmem:[%s305 + $0x4] sm:$0xf]
        %v381 = vld [vmem:[%s305 + $0x8] sm:$0xf]
        %v382 = vld [vmem:[%s305 + $0xc] sm:$0xf]
        %v385 = vunpack.c.l.b16 %v377
        %v386 = vunpack.c.l.b16 %v378
        %v387 = vpack.c.b16 %v386, %v385
        %v392 = vunpack.c.l.b16 %v379
        %v393 = vunpack.c.l.b16 %v380
        %v394 = vunpack.c.l.b16 %v381
        %v395 = vunpack.c.l.b16 %v382
        %v396 = vpack.c.b16 %v393, %v392
        %v397 = vpack.c.b16 %v395, %v394
        %vm400 = vcmask 261120
        %v402 = vsel %vm400, %v387, 0
        %404 = vmatprep.subr.bf16.mxu0 0
        %405 = vmatpush1.bf16.msra.mxu0 %v396
        %406 = vmatprep.subr.bf16.mxu0 0
        %407 = vmatpush1.bf16.msra.mxu0 %v397
        %408 = vmatprep.subr.bf16.mxu0 0
        %409 = vmatpush1.bf16.msra.mxu0 0
        %410 = vmatprep.subr.bf16.mxu0 0
        %411 = vmatpush1.bf16.msra.mxu0 0
        %412 = vmatprep.subr.bf16.mxu0 0
        %413 = vmatpush1.bf16.msra.mxu0 0
        %414 = vmatprep.subr.bf16.mxu0 0
        %415 = vmatpush1.bf16.msra.mxu0 0
        %416 = vmatprep.subr.bf16.mxu0 0
        %417 = vmatpush1.bf16.msra.mxu0 0
        %418 = vmatprep.subr.bf16.mxu0 0
        %419 = vmatpush1.bf16.msra.mxu0 0
        %420 = vmatprep.subr.bf16.mxu0 0
        %421 = vmatpush1.bf16.msra.mxu0 0
        %422 = vmatprep.subr.bf16.mxu0 0
        %423 = vmatpush1.bf16.msra.mxu0 0
        %424 = vmatprep.subr.bf16.mxu0 0
        %425 = vmatpush1.bf16.msra.mxu0 0
        %426 = vmatprep.subr.bf16.mxu0 0
        %427 = vmatpush1.bf16.msra.mxu0 0
        %428 = vmatprep.subr.bf16.mxu0 0
        %429 = vmatpush1.bf16.msra.mxu0 0
        %430 = vmatprep.subr.bf16.mxu0 0
        %431 = vmatpush1.bf16.msra.mxu0 0
        %432 = vmatprep.subr.bf16.mxu0 0
        %433 = vmatpush1.bf16.msra.mxu0 0
        %434 = vmatprep.subr.bf16.mxu0 0
        %435 = vmatpush1.bf16.msra.mxu0 0
        %436 = vmatprep.mubr.bf16.mxu0 0
        %437 = vmatmul.mubr.bf16.gmra.mrb[0].mxu0 %v402
        %v438 = vpop.f32.mrb[0].mxu0
        %v439 = vadd.f32 0.0, %v438
        %v440 = vpop.f32.mrb[0].mxu0
        %v441 = vpop.f32.mrb[0].mxu0
        %v442 = vadd.f32 0.0, %v441
        %v443 = vpop.f32.mrb[0].mxu0
        %444 = vdwg.mxu0
        %v445 = vmul.f32 %v439, %v439
        %v446 = vmul.f32 %v442, %v442
        %v447 = vmul.f32 %v439, %v445
        %v448 = vmul.f32 %v442, %v446
        %v449 = vmul.f32 %v447, 0.044715
        %v450 = vmul.f32 %v448, 0.044715
        %v451 = vadd.f32 %v439, %v449
        %v452 = vadd.f32 %v442, %v450
        %v453 = vmul.f32 %v451, 0.7978846
        %v454 = vmul.f32 %v452, 0.7978846
        %v455 = vtanh.pop %v453
        %v456 = vtanh.pop %v454
        %v457 = vadd.f32 %v455, 1.0
        %v458 = vadd.f32 %v456, 1.0
        %v459 = vmul.f32 %v457, 0.5
        %v460 = vmul.f32 %v458, 0.5
        %v461 = vmul.f32 %v439, %v459
        %v462 = vmul.f32 %v442, %v460
        %v463 = vld [vmem:[%s323] sm:$0xff]
        %v464 = vld [vmem:[%s323 + $0x8] sm:$0xff]
        %466 = vset.pattern.permute.xlu0 0
        %467 = vperm.xlu0 %466, %v463
        %v468 = vpop.permute.xlu0 %467
        %471 = vset.pattern.permute.xlu0 0
        %472 = vperm.xlu0 %471, %v464
        %v473 = vpop.permute.xlu0 %472
        %v475 = vmul.f32 %v461, %v468
        %v476 = vmul.f32 %v462, %v473
        %v477 = vld [vmem:[%s362] sm:$0xff]
        %v478 = vld [vmem:[%s362 + $0x8] sm:$0xff]
        %v479 = vpack.c.bf16 %v476, %v475
        %v480 = vld [vmem:[%s314] sm:$0xf]
        %v481 = vld [vmem:[%s314 + $0x4] sm:$0xf]
        %v482 = vld [vmem:[%s314 + $0x8] sm:$0xf]
        %v483 = vld [vmem:[%s314 + $0xc] sm:$0xf]
        %v484 = vld [vmem:[%s314 + $0x10] sm:$0xf]
        %v485 = vld [vmem:[%s314 + $0x14] sm:$0xf]
        %v486 = vld [vmem:[%s314 + $0x18] sm:$0xf]
        %v487 = vld [vmem:[%s314 + $0x1c] sm:$0xf]
        %v496 = vunpack.c.l.b16 %v480
        %v497 = vunpack.c.l.b16 %v481
        %v498 = vunpack.c.l.b16 %v482
        %v499 = vunpack.c.l.b16 %v483
        %v500 = vunpack.c.l.b16 %v484
        %v501 = vunpack.c.l.b16 %v485
        %v502 = vunpack.c.l.b16 %v486
        %v503 = vunpack.c.l.b16 %v487
        %v504 = vpack.c.b16 %v497, %v496
        %v505 = vpack.c.b16 %v499, %v498
        %v506 = vpack.c.b16 %v501, %v500
        %v507 = vpack.c.b16 %v503, %v502
        %vm512 = vcmask 523264
        %v514 = vsel %vm512, %v479, 0
        %516 = vmatprep.subr.bf16.mxu0 0
        %517 = vmatpush1.bf16.msra.mxu0 %v504
        %518 = vmatprep.subr.bf16.mxu0 0
        %519 = vmatpush1.bf16.msra.mxu0 %v505
        %520 = vmatprep.subr.bf16.mxu0 0
        %521 = vmatpush1.bf16.msra.mxu0 %v506
        %522 = vmatprep.subr.bf16.mxu0 0
        %523 = vmatpush1.bf16.msra.mxu0 %v507
        %524 = vmatprep.subr.bf16.mxu0 0
        %525 = vmatpush1.bf16.msra.mxu0 0
        %526 = vmatprep.subr.bf16.mxu0 0
        %527 = vmatpush1.bf16.msra.mxu0 0
        %528 = vmatprep.subr.bf16.mxu0 0
        %529 = vmatpush1.bf16.msra.mxu0 0
        %530 = vmatprep.subr.bf16.mxu0 0
        %531 = vmatpush1.bf16.msra.mxu0 0
        %532 = vmatprep.subr.bf16.mxu0 0
        %533 = vmatpush1.bf16.msra.mxu0 0
        %534 = vmatprep.subr.bf16.mxu0 0
        %535 = vmatpush1.bf16.msra.mxu0 0
        %536 = vmatprep.subr.bf16.mxu0 0
        %537 = vmatpush1.bf16.msra.mxu0 0
        %538 = vmatprep.subr.bf16.mxu0 0
        %539 = vmatpush1.bf16.msra.mxu0 0
        %540 = vmatprep.subr.bf16.mxu0 0
        %541 = vmatpush1.bf16.msra.mxu0 0
        %542 = vmatprep.subr.bf16.mxu0 0
        %543 = vmatpush1.bf16.msra.mxu0 0
        %544 = vmatprep.subr.bf16.mxu0 0
        %545 = vmatpush1.bf16.msra.mxu0 0
        %546 = vmatprep.subr.bf16.mxu0 0
        %547 = vmatpush1.bf16.msra.mxu0 0
        %548 = vmatprep.mubr.bf16.mxu0 0
        %549 = vmatmul.mubr.bf16.gmra.mrb[0].mxu0 %v514
        %v550 = vpop.f32.mrb[0].mxu0
        %v551 = vadd.f32 0.0, %v550
        %v552 = vpop.f32.mrb[0].mxu0
        %v553 = vpop.f32.mrb[0].mxu0
        %v554 = vadd.f32 0.0, %v553
        %v555 = vpop.f32.mrb[0].mxu0
        %556 = vdwg.mxu0
        %v557 = vadd.f32 %v477, %v551
        %v558 = vadd.f32 %v478, %v554
        %559 = vst.msk [vmem:[%s362] sm:$0xff] %vm400, %v557
        %560 = vst.msk [vmem:[%s362 + $0x8] sm:$0xff] %vm400, %v558
        %s561 = sand.u32 %s164, 1
        %s562 = scalar_lea.sflag [#allocation6], %s561
        %s563 = sand.u32 %s164, 1
        %s564 = smul.addr %s563, 16
        %s565 = scalar_lea.vmem [#allocation12], %s564
        // Predicated region
        $region57: #{tpu_custom_call.1} parent=35 // pred_check
          %p566 = pneg %p174
        $region58: #{tpu_custom_call.1} parent=35 // pred_check_branch
          %568 = sbr.rel (%p566) target = $region60
        $region59: #{tpu_custom_call.1} parent=35 // pred_region
          %s569 = smul.u32 2, %s36
          %s571 = ssub.s32 256, 256
          %572 = vsyncadd %s562, %s571
          %s573 = smul.addr %s569, 128
          %s574 = scalar_lea.hbm %s5, %s573
          %s575 = sshll.u32 %s565, 4
          %s576 = int_to_ptr.vmem [resolvable:$true] %s575
          %581 = dma.vmem_to_hbm [thread:$0]  %s576, 256, %s574, %s562, 128, 128, 8
        $region60: #{tpu_custom_call.1} parent=35 // pred_fallthru
          _
      $region36: #{tpu_custom_call.1} parent=5 // pred_fallthru
        _
      %p582 = scmp.le.s32.totalorder 2, %s27
      // Predicated region
      $region61: #{tpu_custom_call.1} parent=5 // pred_check
        %p583 = pneg %p582
      $region62: #{tpu_custom_call.1} parent=5 // pred_check_branch
        %585 = sbr.rel (%p583) target = $region64
      $region63: #{tpu_custom_call.1} parent=5 // pred_region
        %s586 = ssub.s32 %s27, 2
        // Predicated region
        $region65: #{tpu_custom_call.1} parent=63 // pred_check
          %p587 = pneg %p180
        $region66: #{tpu_custom_call.1} parent=63 // pred_check_branch
          %589 = sbr.rel (%p587) target = $region68
        $region67: #{tpu_custom_call.1} parent=63 // pred_region
          %s590 = sand.u32 %s165, 1
          %s591 = scalar_lea.sflag [#allocation6], %s590
          %s592 = sand.u32 %s165, 1
          %s593 = smul.addr %s592, 16
          %s594 = scalar_lea.vmem [#allocation12], %s593
          %595 = dma.done %s591, 256
        $region68: #{tpu_custom_call.1} parent=63 // pred_fallthru
          _
      $region64: #{tpu_custom_call.1} parent=5 // pred_fallthru
        _
    $region6: #{tpu_custom_call.1} parent=1 // loop_footer
      %s31 = sadd.s32 1, %s27
    $region7: #{tpu_custom_call.1} parent=1 // loop_footer_branch
      %26 = sbr.rel target = $region3
    $region8: #{tpu_custom_call.1} parent=1 // loop_exit
      _
    %596 = vsyncpa [#allocation5], 1
    %s597 = scalar_lea.sflag [#allocation5], 1
    %598 = vsyncpa %s597, 1
    %599 = vsyncpa [#allocation8], 1
    %s600 = scalar_lea.sflag [#allocation8], 1
    %601 = vsyncpa %s600, 1
    %602 = vsyncpa [#allocation11], 1
    %s603 = scalar_lea.sflag [#allocation11], 1
    %604 = vsyncpa %s603, 1
    %605 = vsyncpa [#allocation6], 1
    %s606 = scalar_lea.sflag [#allocation6], 1
    %607 = vsyncpa %s606, 1

</llo_original>
